<compile_context>
chip_gen: v6e
topology: v6e:2x2x1
jax: 0.10.0
libtpu: 0.0.40
codegen_flags: <defaults>
</compile_context>

<pallas_src>
import functools
import math

import jax
import jax.numpy as jnp
from jax.experimental import pallas as pl
from jax.experimental.pallas import tpu as pltpu

SMOOTH = 1e-5
LANES = 128
SUBLANES = 8
NCHUNKS = 2               # leading "parallel" grid axis (v7x megacore sharding)
GROUP_ROWS = 64           # rows per inner-loop step (temporaries stay in vregs)
MAX_BLOCK_ROWS = 4096     # rows per grid step (f32: 2 MiB / stream / step)
NUM_PARTIALS = 4          # [count1, sum p*t, sum p^2, sum_{t=1} p^2]


def _round_up(v, m):
    return ((v + m - 1) // m) * m


def _accumulate(x_ref, t_ref, out_ref, row0, n_valid, *, masked, unroll):
    """Accumulate class-conditional partial sums for this block into out_ref."""
    block_rows = x_ref.shape[0]
    n_groups = block_rows // GROUP_ROWS

    def fold(v):
        # (GROUP_ROWS, 128) -> (8, 128): layout-preserving reshape, pure VPU adds.
        return jnp.sum(v.reshape(GROUP_ROWS // SUBLANES, SUBLANES, LANES), axis=0)

    def body(g, carry):
        cnt1, spt, sp2, sp2t = carry
        r = pl.multiple_of(g * GROUP_ROWS, GROUP_ROWS)
        xs = x_ref[pl.ds(r, GROUP_ROWS), :].astype(jnp.float32)
        ts = t_ref[pl.ds(r, GROUP_ROWS), :].astype(jnp.float32)
        p = 0.5 * (jnp.tanh(0.5 * xs) + 1.0)          # sigmoid via one EUP push
        if masked:
            elem = ((row0 + r) * LANES
                    + jax.lax.broadcasted_iota(jnp.int32, (GROUP_ROWS, LANES), 0) * LANES
                    + jax.lax.broadcasted_iota(jnp.int32, (GROUP_ROWS, LANES), 1))
            ok = elem < n_valid
            p = jnp.where(ok, p, 0.0)
            ts = jnp.where(ok, ts, 0.0)
        # t in {0,1}: t*t == t, so arithmetic blends replace compare/select.
        pt = p * ts
        p2 = p * p
        p2t = p2 * ts
        return (cnt1 + fold(ts), spt + fold(pt), sp2 + fold(p2), sp2t + fold(p2t))

    zero = jnp.zeros((SUBLANES, LANES), jnp.float32)
    cnt1, spt, sp2, sp2t = jax.lax.fori_loop(
        0, n_groups, body, (zero, zero, zero, zero),
        unroll=min(unroll, n_groups))
    out_ref[0] += cnt1      # count of class-1 elements
    out_ref[1] += spt       # sum_{t=1} p
    out_ref[2] += sp2       # sum p^2 (all elements)
    out_ref[3] += sp2t      # sum_{t=1} p^2


def _balanced_loss_kernel(x_ref, t_ref, out_ref, *, n_valid, unroll):
    c = pl.program_id(0)
    i = pl.program_id(1)

    @pl.when(i == 0)
    def _():
        out_ref[...] = jnp.zeros_like(out_ref)

    block_rows = x_ref.shape[0]
    # Unclamped global row start of this block (used only for tail masking).
    row0 = (c * pl.num_programs(1) + i) * block_rows
    block_full = (row0 + block_rows) * LANES <= n_valid

    @pl.when(block_full)
    def _():
        _accumulate(x_ref, t_ref, out_ref, row0, n_valid, masked=False, unroll=unroll)

    @pl.when(jnp.logical_not(block_full))
    def _():
        _accumulate(x_ref, t_ref, out_ref, row0, n_valid, masked=True, unroll=unroll)


def balanced_loss(input_logits, target, smooth=SMOOTH):
    # NOTE: like the original module in practice, assumes binary targets {0,1}.
    n = math.prod(input_logits.shape)
    x = input_logits.reshape(-1)                    # native dtype, no cast
    t = target.reshape(-1)
    if t.dtype == jnp.bool_:
        t = t.astype(jnp.int8)                      # 1 B/elem stream for bool labels

    rem = n % LANES
    if rem:
        # Rare misaligned case: minimal lane-pad so the free 2-D reshape exists.
        # Padded elements are masked out inside the kernel (pad value irrelevant).
        pad = LANES - rem
        x = jnp.pad(x, (0, pad))
        t = jnp.pad(t, (0, pad))
    rows = (n + LANES - 1) // LANES
    x2 = x.reshape(rows, LANES)
    t2 = t.reshape(rows, LANES)

    rows_per_chunk = pl.cdiv(rows, NCHUNKS)
    block_rows = min(MAX_BLOCK_ROWS, _round_up(rows_per_chunk, GROUP_ROWS))
    tiles = pl.cdiv(rows_per_chunk, block_rows)
    total_blocks = pl.cdiv(rows, block_rows)

    def in_map(c, i):
        # Clamp so edge/empty blocks never DMA out of bounds; the kernel masks
        # them using the *unclamped* global row index, so re-read blocks add 0.
        return (jnp.minimum(c * tiles + i, total_blocks - 1), 0)

    kernel = functools.partial(_balanced_loss_kernel, n_valid=n, unroll=8)

    partials = pl.pallas_call(
        kernel,
        out_shape=jax.ShapeDtypeStruct(
            (NCHUNKS * NUM_PARTIALS, SUBLANES, LANES), jnp.float32),
        grid_spec=pltpu.PrefetchScalarGridSpec(
            num_scalar_prefetch=0,
            grid=(NCHUNKS, tiles),
            in_specs=[
                pl.BlockSpec((block_rows, LANES), in_map),
                pl.BlockSpec((block_rows, LANES), in_map),
            ],
            out_specs=pl.BlockSpec((NUM_PARTIALS, SUBLANES, LANES),
                                   lambda c, i: (c, 0, 0)),
        ),
        compiler_params=pltpu.CompilerParams(
            dimension_semantics=("parallel", "arbitrary"),
            vmem_limit_bytes=32 * 1024 * 1024),
    )(x2, t2)

    # Finalize: tiny cross-lane reduce + per-class weight math on 4 scalars.
    sums = jnp.sum(
        partials.reshape(NCHUNKS, NUM_PARTIALS, SUBLANES, LANES),
        axis=(0, 2, 3))
    count1, p1, s_all, s1 = sums[0], sums[1], sums[2], sums[3]
    count0 = jnp.float32(n) - count1
    s0 = s_all - s1
    w0 = 1.0 / (count0 + smooth) ** 2
    w1 = 1.0 / (count1 + smooth) ** 2
    inter = w1 * p1
    denom = w0 * s0 + w1 * (s1 + count1)   # sum_{t=1} t^2 == count1
    return 1.0 - (2.0 * inter + smooth) / (denom + smooth)


def _reference(input_logits, target, smooth=SMOOTH):
    # Pure-JAX reference mirroring the PyTorch forward (binary class set; the
    # unused weight entry is never indexed, matching torch.bincount behavior).
    p = jax.nn.sigmoid(input_logits.reshape(-1).astype(jnp.float32))
    t = target.reshape(-1).astype(jnp.float32)
    t_int = t.astype(jnp.int32)
    freq = jnp.bincount(t_int, length=2).astype(jnp.float32)
    cw = 1.0 / (freq + smooth) ** 2
    w = cw[t_int]
    inter = jnp.sum(w * p * t)
    den = jnp.sum(w * (p * p + t * t))
    return 1.0 - (2.0 * inter + smooth) / (den + smooth)


if __name__ == "__main__":
    key = jax.random.PRNGKey(0)
    k1, k2 = jax.random.split(key)
    # NCHW, small shapes: batch=2, channels=4, spatial=16x16
    x = jax.random.normal(k1, (2, 4, 16, 16), dtype=jnp.float32)
    tgt = (jax.random.uniform(k2, (2, 4, 16, 16)) > 0.5).astype(jnp.float32)

    out = jax.block_until_ready(balanced_loss(x, tgt))
    ref = jax.block_until_ready(_reference(x, tgt))
    assert jnp.allclose(out, ref, rtol=1e-4, atol=1e-5), (out, ref)
    print("KERNEL_OK")
</pallas_src>

<mosaic_0001>
module attributes {stable_mosaic.version = 11 : i64} {
  func.func @_balanced_loss_kernel(%arg0: i32, %arg1: i32, %arg2: memref<64x128xf32, #tpu.memory_space<vmem>>, %arg3: memref<64x128xf32, #tpu.memory_space<vmem>>, %arg4: memref<4x8x128xf32, #tpu.memory_space<vmem>>) attributes {dimension_semantics = [#tpu.dimension_semantics<parallel>, #tpu.dimension_semantics<arbitrary>], iteration_bounds = array<i64: 2, 1>, scalar_prefetch = 0 : i64, scratch_operands = 0 : i64, tpu.core_type = #tpu.core_type<tc>, window_params = [{transform_indices = @transform_0, window_bounds = array<i64: 64, 128>}, {transform_indices = @transform_1, window_bounds = array<i64: 64, 128>}, {transform_indices = @transform_2, window_bounds = array<i64: 4, 8, 128>}]} {
    %c0_i32 = arith.constant 0 : i32
    %0 = arith.cmpi eq, %arg1, %c0_i32 : i32
    %1 = arith.extui %0 : i1 to i32
    %c0_i32_0 = arith.constant 0 : i32
    %2 = arith.cmpi ne, %1, %c0_i32_0 : i32
    scf.if %2 {
      %cst = arith.constant 0.000000e+00 : f32
      %14 = vector.broadcast %cst : f32 to vector<4x8x128xf32>
      %c0 = arith.constant 0 : index
      %c0_4 = arith.constant 0 : index
      %c0_5 = arith.constant 0 : index
      %15 = vector.load %arg4[%c0, %c0_4, %c0_5] : memref<4x8x128xf32, #tpu.memory_space<vmem>>, vector<4x8x128xf32>
      tpu.vector_store %arg4[%c0, %c0_4, %c0_5], %14 {strides = array<i32>} : memref<4x8x128xf32, #tpu.memory_space<vmem>>, vector<4x8x128xf32>,
    } else {
    }
    %c1_i32 = arith.constant 1 : i32
    %3 = arith.muli %arg0, %c1_i32 : i32
    %4 = arith.addi %3, %arg1 : i32
    %c64_i32 = arith.constant 64 : i32
    %5 = arith.muli %4, %c64_i32 : i32
    %c64_i32_1 = arith.constant 64 : i32
    %6 = arith.addi %5, %c64_i32_1 : i32
    %c128_i32 = arith.constant 128 : i32
    %7 = arith.muli %6, %c128_i32 : i32
    %c2048_i32 = arith.constant 2048 : i32
    %8 = arith.cmpi sle, %7, %c2048_i32 : i32
    %9 = arith.extui %8 : i1 to i32
    %c0_i32_2 = arith.constant 0 : i32
    %10 = arith.cmpi ne, %9, %c0_i32_2 : i32
    scf.if %10 {
      %cst = arith.constant 0.000000e+00 : f32
      %14 = vector.broadcast %cst : f32 to vector<8x128xf32>
      %c0_i32_4 = arith.constant 0 : i32
      %c64_i32_5 = arith.constant 64 : i32
      %15 = arith.muli %c0_i32_4, %c64_i32_5 : i32
      %16 = tpu.assume_multiple %15, 64 : i32
      %17 = arith.index_cast %16 : i32 to index
      %c0 = arith.constant 0 : index
      %18 = vector.load %arg2[%17, %c0] : memref<64x128xf32, #tpu.memory_space<vmem>>, vector<64x128xf32>
      %19 = arith.index_cast %16 : i32 to index
      %c0_6 = arith.constant 0 : index
      %20 = vector.load %arg3[%19, %c0_6] : memref<64x128xf32, #tpu.memory_space<vmem>>, vector<64x128xf32>
      %cst_7 = arith.constant 5.000000e-01 : f32
      %21 = vector.broadcast %cst_7 : f32 to vector<64x128xf32>
      %22 = arith.mulf %21, %18 : vector<64x128xf32>
      %23 = math.tanh %22 : vector<64x128xf32>
      %cst_8 = arith.constant 1.000000e+00 : f32
      %24 = vector.broadcast %cst_8 : f32 to vector<64x128xf32>
      %25 = arith.addf %23, %24 : vector<64x128xf32>
      %cst_9 = arith.constant 5.000000e-01 : f32
      %26 = vector.broadcast %cst_9 : f32 to vector<64x128xf32>
      %27 = arith.mulf %26, %25 : vector<64x128xf32>
      %28 = arith.mulf %27, %20 : vector<64x128xf32>
      %29 = arith.mulf %27, %27 : vector<64x128xf32>
      %30 = arith.mulf %29, %20 : vector<64x128xf32>
      %31 = vector.shape_cast %20 : vector<64x128xf32> to vector<8x8x128xf32>
      %cst_10 = arith.constant dense<0.000000e+00> : vector<8x128xf32>
      %32 = vector.multi_reduction <add>, %31, %cst_10 [0] : vector<8x8x128xf32> to vector<8x128xf32>
      %33 = arith.addf %14, %32 : vector<8x128xf32>
      %34 = vector.shape_cast %28 : vector<64x128xf32> to vector<8x8x128xf32>
      %cst_11 = arith.constant dense<0.000000e+00> : vector<8x128xf32>
      %35 = vector.multi_reduction <add>, %34, %cst_11 [0] : vector<8x8x128xf32> to vector<8x128xf32>
      %36 = arith.addf %14, %35 : vector<8x128xf32>
      %37 = vector.shape_cast %29 : vector<64x128xf32> to vector<8x8x128xf32>
      %cst_12 = arith.constant dense<0.000000e+00> : vector<8x128xf32>
      %38 = vector.multi_reduction <add>, %37, %cst_12 [0] : vector<8x8x128xf32> to vector<8x128xf32>
      %39 = arith.addf %14, %38 : vector<8x128xf32>
      %40 = vector.shape_cast %30 : vector<64x128xf32> to vector<8x8x128xf32>
      %cst_13 = arith.constant dense<0.000000e+00> : vector<8x128xf32>
      %41 = vector.multi_reduction <add>, %40, %cst_13 [0] : vector<8x8x128xf32> to vector<8x128xf32>
      %42 = arith.addf %14, %41 : vector<8x128xf32>
      %c1_i32_14 = arith.constant 1 : i32
      %c0_15 = arith.constant 0 : index
      %c0_16 = arith.constant 0 : index
      %c0_17 = arith.constant 0 : index
      %43 = vector.load %arg4[%c0_15, %c0_16, %c0_17] : memref<4x8x128xf32, #tpu.memory_space<vmem>>, vector<1x8x128xf32>
      %44 = vector.shape_cast %43 : vector<1x8x128xf32> to vector<8x128xf32>
      %45 = arith.addf %44, %33 : vector<8x128xf32>
      %c0_18 = arith.constant 0 : index
      %c0_19 = arith.constant 0 : index
      %c0_20 = arith.constant 0 : index
      %46 = vector.load %arg4[%c0_18, %c0_19, %c0_20] : memref<4x8x128xf32, #tpu.memory_space<vmem>>, vector<1x8x128xf32>
      %47 = vector.shape_cast %46 : vector<1x8x128xf32> to vector<8x128xf32>
      %48 = vector.shape_cast %45 : vector<8x128xf32> to vector<1x8x128xf32>
      tpu.vector_store %arg4[%c0_18, %c0_19, %c0_20], %48 {strides = array<i32>} : memref<4x8x128xf32, #tpu.memory_space<vmem>>, vector<1x8x128xf32>,
      %c1 = arith.constant 1 : index
      %c0_21 = arith.constant 0 : index
      %c0_22 = arith.constant 0 : index
      %49 = vector.load %arg4[%c1, %c0_21, %c0_22] : memref<4x8x128xf32, #tpu.memory_space<vmem>>, vector<1x8x128xf32>
      %50 = vector.shape_cast %49 : vector<1x8x128xf32> to vector<8x128xf32>
      %51 = arith.addf %50, %36 : vector<8x128xf32>
      %c1_23 = arith.constant 1 : index
      %c0_24 = arith.constant 0 : index
      %c0_25 = arith.constant 0 : index
      %52 = vector.load %arg4[%c1_23, %c0_24, %c0_25] : memref<4x8x128xf32, #tpu.memory_space<vmem>>, vector<1x8x128xf32>
      %53 = vector.shape_cast %52 : vector<1x8x128xf32> to vector<8x128xf32>
      %54 = vector.shape_cast %51 : vector<8x128xf32> to vector<1x8x128xf32>
      tpu.vector_store %arg4[%c1_23, %c0_24, %c0_25], %54 {strides = array<i32>} : memref<4x8x128xf32, #tpu.memory_space<vmem>>, vector<1x8x128xf32>,
      %c2 = arith.constant 2 : index
      %c0_26 = arith.constant 0 : index
      %c0_27 = arith.constant 0 : index
      %55 = vector.load %arg4[%c2, %c0_26, %c0_27] : memref<4x8x128xf32, #tpu.memory_space<vmem>>, vector<1x8x128xf32>
      %56 = vector.shape_cast %55 : vector<1x8x128xf32> to vector<8x128xf32>
      %57 = arith.addf %56, %39 : vector<8x128xf32>
      %c2_28 = arith.constant 2 : index
      %c0_29 = arith.constant 0 : index
      %c0_30 = arith.constant 0 : index
      %58 = vector.load %arg4[%c2_28, %c0_29, %c0_30] : memref<4x8x128xf32, #tpu.memory_space<vmem>>, vector<1x8x128xf32>
      %59 = vector.shape_cast %58 : vector<1x8x128xf32> to vector<8x128xf32>
      %60 = vector.shape_cast %57 : vector<8x128xf32> to vector<1x8x128xf32>
      tpu.vector_store %arg4[%c2_28, %c0_29, %c0_30], %60 {strides = array<i32>} : memref<4x8x128xf32, #tpu.memory_space<vmem>>, vector<1x8x128xf32>,
      %c3 = arith.constant 3 : index
      %c0_31 = arith.constant 0 : index
      %c0_32 = arith.constant 0 : index
      %61 = vector.load %arg4[%c3, %c0_31, %c0_32] : memref<4x8x128xf32, #tpu.memory_space<vmem>>, vector<1x8x128xf32>
      %62 = vector.shape_cast %61 : vector<1x8x128xf32> to vector<8x128xf32>
      %63 = arith.addf %62, %42 : vector<8x128xf32>
      %c3_33 = arith.constant 3 : index
      %c0_34 = arith.constant 0 : index
      %c0_35 = arith.constant 0 : index
      %64 = vector.load %arg4[%c3_33, %c0_34, %c0_35] : memref<4x8x128xf32, #tpu.memory_space<vmem>>, vector<1x8x128xf32>
      %65 = vector.shape_cast %64 : vector<1x8x128xf32> to vector<8x128xf32>
      %66 = vector.shape_cast %63 : vector<8x128xf32> to vector<1x8x128xf32>
      tpu.vector_store %arg4[%c3_33, %c0_34, %c0_35], %66 {strides = array<i32>} : memref<4x8x128xf32, #tpu.memory_space<vmem>>, vector<1x8x128xf32>,
    } else {
    }
    %true = arith.constant true
    %11 = arith.xori %8, %true : i1
    %12 = arith.extui %11 : i1 to i32
    %c0_i32_3 = arith.constant 0 : i32
    %13 = arith.cmpi ne, %12, %c0_i32_3 : i32
    scf.if %13 {
      %cst = arith.constant 0.000000e+00 : f32
      %14 = vector.broadcast %cst : f32 to vector<8x128xf32>
      %c0_i32_4 = arith.constant 0 : i32
      %c64_i32_5 = arith.constant 64 : i32
      %15 = arith.muli %c0_i32_4, %c64_i32_5 : i32
      %16 = tpu.assume_multiple %15, 64 : i32
      %17 = arith.index_cast %16 : i32 to index
      %c0 = arith.constant 0 : index
      %18 = vector.load %arg2[%17, %c0] : memref<64x128xf32, #tpu.memory_space<vmem>>, vector<64x128xf32>
      %19 = arith.index_cast %16 : i32 to index
      %c0_6 = arith.constant 0 : index
      %20 = vector.load %arg3[%19, %c0_6] : memref<64x128xf32, #tpu.memory_space<vmem>>, vector<64x128xf32>
      %cst_7 = arith.constant 5.000000e-01 : f32
      %21 = vector.broadcast %cst_7 : f32 to vector<64x128xf32>
      %22 = arith.mulf %21, %18 : vector<64x128xf32>
      %23 = math.tanh %22 : vector<64x128xf32>
      %cst_8 = arith.constant 1.000000e+00 : f32
      %24 = vector.broadcast %cst_8 : f32 to vector<64x128xf32>
      %25 = arith.addf %23, %24 : vector<64x128xf32>
      %cst_9 = arith.constant 5.000000e-01 : f32
      %26 = vector.broadcast %cst_9 : f32 to vector<64x128xf32>
      %27 = arith.mulf %26, %25 : vector<64x128xf32>
      %28 = arith.addi %5, %16 : i32
      %c128_i32_10 = arith.constant 128 : i32
      %29 = arith.muli %28, %c128_i32_10 : i32
      %30 = tpu.iota {dimensions = array<i32: 0>} : vector<64x128xi32>
      %c128_i32_11 = arith.constant 128 : i32
      %31 = vector.broadcast %c128_i32_11 : i32 to vector<64x128xi32>
      %32 = arith.muli %30, %31 : vector<64x128xi32>
      %33 = vector.broadcast %29 : i32 to vector<64x128xi32>
      %34 = arith.addi %33, %32 : vector<64x128xi32>
      %35 = tpu.iota {dimensions = array<i32: 1>} : vector<64x128xi32>
      %36 = arith.addi %34, %35 : vector<64x128xi32>
      %c2048_i32_12 = arith.constant 2048 : i32
      %37 = vector.broadcast %c2048_i32_12 : i32 to vector<64x128xi32>
      %38 = arith.cmpi slt, %36, %37 : vector<64x128xi32>
      %cst_13 = arith.constant 0.000000e+00 : f32
      %39 = vector.broadcast %cst_13 : f32 to vector<64x128xf32>
      %40 = arith.select %38, %27, %39 : vector<64x128xi1>, vector<64x128xf32>
      %cst_14 = arith.constant 0.000000e+00 : f32
      %41 = vector.broadcast %cst_14 : f32 to vector<64x128xf32>
      %42 = arith.select %38, %20, %41 : vector<64x128xi1>, vector<64x128xf32>
      %43 = arith.mulf %40, %42 : vector<64x128xf32>
      %44 = arith.mulf %40, %40 : vector<64x128xf32>
      %45 = arith.mulf %44, %42 : vector<64x128xf32>
      %46 = vector.shape_cast %42 : vector<64x128xf32> to vector<8x8x128xf32>
      %cst_15 = arith.constant dense<0.000000e+00> : vector<8x128xf32>
      %47 = vector.multi_reduction <add>, %46, %cst_15 [0] : vector<8x8x128xf32> to vector<8x128xf32>
      %48 = arith.addf %14, %47 : vector<8x128xf32>
      %49 = vector.shape_cast %43 : vector<64x128xf32> to vector<8x8x128xf32>
      %cst_16 = arith.constant dense<0.000000e+00> : vector<8x128xf32>
      %50 = vector.multi_reduction <add>, %49, %cst_16 [0] : vector<8x8x128xf32> to vector<8x128xf32>
      %51 = arith.addf %14, %50 : vector<8x128xf32>
      %52 = vector.shape_cast %44 : vector<64x128xf32> to vector<8x8x128xf32>
      %cst_17 = arith.constant dense<0.000000e+00> : vector<8x128xf32>
      %53 = vector.multi_reduction <add>, %52, %cst_17 [0] : vector<8x8x128xf32> to vector<8x128xf32>
      %54 = arith.addf %14, %53 : vector<8x128xf32>
      %55 = vector.shape_cast %45 : vector<64x128xf32> to vector<8x8x128xf32>
      %cst_18 = arith.constant dense<0.000000e+00> : vector<8x128xf32>
      %56 = vector.multi_reduction <add>, %55, %cst_18 [0] : vector<8x8x128xf32> to vector<8x128xf32>
      %57 = arith.addf %14, %56 : vector<8x128xf32>
      %c1_i32_19 = arith.constant 1 : i32
      %c0_20 = arith.constant 0 : index
      %c0_21 = arith.constant 0 : index
      %c0_22 = arith.constant 0 : index
      %58 = vector.load %arg4[%c0_20, %c0_21, %c0_22] : memref<4x8x128xf32, #tpu.memory_space<vmem>>, vector<1x8x128xf32>
      %59 = vector.shape_cast %58 : vector<1x8x128xf32> to vector<8x128xf32>
      %60 = arith.addf %59, %48 : vector<8x128xf32>
      %c0_23 = arith.constant 0 : index
      %c0_24 = arith.constant 0 : index
      %c0_25 = arith.constant 0 : index
      %61 = vector.load %arg4[%c0_23, %c0_24, %c0_25] : memref<4x8x128xf32, #tpu.memory_space<vmem>>, vector<1x8x128xf32>
      %62 = vector.shape_cast %61 : vector<1x8x128xf32> to vector<8x128xf32>
      %63 = vector.shape_cast %60 : vector<8x128xf32> to vector<1x8x128xf32>
      tpu.vector_store %arg4[%c0_23, %c0_24, %c0_25], %63 {strides = array<i32>} : memref<4x8x128xf32, #tpu.memory_space<vmem>>, vector<1x8x128xf32>,
      %c1 = arith.constant 1 : index
      %c0_26 = arith.constant 0 : index
      %c0_27 = arith.constant 0 : index
      %64 = vector.load %arg4[%c1, %c0_26, %c0_27] : memref<4x8x128xf32, #tpu.memory_space<vmem>>, vector<1x8x128xf32>
      %65 = vector.shape_cast %64 : vector<1x8x128xf32> to vector<8x128xf32>
      %66 = arith.addf %65, %51 : vector<8x128xf32>
      %c1_28 = arith.constant 1 : index
      %c0_29 = arith.constant 0 : index
      %c0_30 = arith.constant 0 : index
      %67 = vector.load %arg4[%c1_28, %c0_29, %c0_30] : memref<4x8x128xf32, #tpu.memory_space<vmem>>, vector<1x8x128xf32>
      %68 = vector.shape_cast %67 : vector<1x8x128xf32> to vector<8x128xf32>
      %69 = vector.shape_cast %66 : vector<8x128xf32> to vector<1x8x128xf32>
      tpu.vector_store %arg4[%c1_28, %c0_29, %c0_30], %69 {strides = array<i32>} : memref<4x8x128xf32, #tpu.memory_space<vmem>>, vector<1x8x128xf32>,
      %c2 = arith.constant 2 : index
      %c0_31 = arith.constant 0 : index
      %c0_32 = arith.constant 0 : index
      %70 = vector.load %arg4[%c2, %c0_31, %c0_32] : memref<4x8x128xf32, #tpu.memory_space<vmem>>, vector<1x8x128xf32>
      %71 = vector.shape_cast %70 : vector<1x8x128xf32> to vector<8x128xf32>
      %72 = arith.addf %71, %54 : vector<8x128xf32>
      %c2_33 = arith.constant 2 : index
      %c0_34 = arith.constant 0 : index
      %c0_35 = arith.constant 0 : index
      %73 = vector.load %arg4[%c2_33, %c0_34, %c0_35] : memref<4x8x128xf32, #tpu.memory_space<vmem>>, vector<1x8x128xf32>
      %74 = vector.shape_cast %73 : vector<1x8x128xf32> to vector<8x128xf32>
      %75 = vector.shape_cast %72 : vector<8x128xf32> to vector<1x8x128xf32>
      tpu.vector_store %arg4[%c2_33, %c0_34, %c0_35], %75 {strides = array<i32>} : memref<4x8x128xf32, #tpu.memory_space<vmem>>, vector<1x8x128xf32>,
      %c3 = arith.constant 3 : index
      %c0_36 = arith.constant 0 : index
      %c0_37 = arith.constant 0 : index
      %76 = vector.load %arg4[%c3, %c0_36, %c0_37] : memref<4x8x128xf32, #tpu.memory_space<vmem>>, vector<1x8x128xf32>
      %77 = vector.shape_cast %76 : vector<1x8x128xf32> to vector<8x128xf32>
      %78 = arith.addf %77, %57 : vector<8x128xf32>
      %c3_38 = arith.constant 3 : index
      %c0_39 = arith.constant 0 : index
      %c0_40 = arith.constant 0 : index
      %79 = vector.load %arg4[%c3_38, %c0_39, %c0_40] : memref<4x8x128xf32, #tpu.memory_space<vmem>>, vector<1x8x128xf32>
      %80 = vector.shape_cast %79 : vector<1x8x128xf32> to vector<8x128xf32>
      %81 = vector.shape_cast %78 : vector<8x128xf32> to vector<1x8x128xf32>
      tpu.vector_store %arg4[%c3_38, %c0_39, %c0_40], %81 {strides = array<i32>} : memref<4x8x128xf32, #tpu.memory_space<vmem>>, vector<1x8x128xf32>,
    } else {
    }
    return
  }
  func.func @transform_0(%arg0: i32, %arg1: i32) -> (i32, i32) {
    %c1_i32 = arith.constant 1 : i32
    %0 = arith.muli %arg0, %c1_i32 : i32
    %1 = arith.addi %0, %arg1 : i32
    %c0_i32 = arith.constant 0 : i32
    %2 = arith.minsi %1, %c0_i32 : i32
    %c0_i32_0 = arith.constant 0 : i32
    %c0_i32_1 = arith.constant 0 : i32
    return %2, %c0_i32_0 : i32, i32
  }
  func.func @transform_1(%arg0: i32, %arg1: i32) -> (i32, i32) {
    %c1_i32 = arith.constant 1 : i32
    %0 = arith.muli %arg0, %c1_i32 : i32
    %1 = arith.addi %0, %arg1 : i32
    %c0_i32 = arith.constant 0 : i32
    %2 = arith.minsi %1, %c0_i32 : i32
    %c0_i32_0 = arith.constant 0 : i32
    %c0_i32_1 = arith.constant 0 : i32
    return %2, %c0_i32_0 : i32, i32
  }
  func.func @transform_2(%arg0: i32, %arg1: i32) -> (i32, i32, i32) {
    %c0_i32 = arith.constant 0 : i32
    %c0_i32_0 = arith.constant 0 : i32
    %c0_i32_1 = arith.constant 0 : i32
    return %arg0, %c0_i32, %c0_i32_0 : i32, i32, i32
  }
}

</mosaic_0001>

<llo_original>
// kernel: tpu_custom_call.1
$region0: #{tpu_custom_call.1}
  #allocation0 [shape = 'u32[]', space=smem, size = 0x4, offset = 0x4, fixed_abs, tag = 'smem constant byte address 0x4 - core index']
  #allocation1 [shape = 'u32[144,128]{1,0:T(1,128)}', space=vmem, size = 0x12000, scoped, tag = 'internal scratch']
  %s0 = inlined_call_operand.hbm [shape: f32[16,128], index: 0, kind: input, shape index: {}]
  %s1 = inlined_call_operand.hbm [shape: f32[16,128], index: 1, kind: input, shape index: {}]
  %s2 = inlined_call_operand.hbm [shape: f32[8,8,128], index: 2, kind: output, shape index: {}]
  %s3 = sld [smem:[#allocation0]]
  $region61: #{tpu_custom_call.1} parent=0
    _
  %s5 = ssub.s32 1, %s3
  %s6 = scalar_select 0, %s5, %s3
  $region1: #{tpu_custom_call.1} parent=0
    #allocation2 [shape = 'u8[65536]{0}', space=vmem, size = 0x10000, scoped, tag = 'input window, operand 0']
    #allocation3 [shape = 's32[2]{0}', space=sflag, size = 0x8, scoped, tag = 'scoped memory for tpu_custom_call.1']
    #allocation4 [shape = 's32[2]{0}', space=sflag, size = 0x8, scoped, tag = 'scoped memory for tpu_custom_call.1']
    #allocation5 [shape = 'u8[65536]{0}', space=vmem, size = 0x10000, scoped, tag = 'input window, operand 1']
    #allocation6 [shape = 's32[2]{0}', space=sflag, size = 0x8, scoped, tag = 'scoped memory for tpu_custom_call.1']
    #allocation7 [shape = 'u8[32768]{0}', space=vmem, size = 0x8000, scoped, tag = 'output window, operand 0']
    %7 = vsyncpa [#allocation3], 0
    %s8 = scalar_lea.sflag [#allocation3], 1
    %9 = vsyncpa %s8, 0
    %10 = vsyncpa [#allocation6], 0
    %s11 = scalar_lea.sflag [#allocation6], 1
    %12 = vsyncpa %s11, 0
    %13 = vsyncpa [#allocation4], 0
    %s14 = scalar_lea.sflag [#allocation4], 1
    %15 = vsyncpa %s14, 0
    loop: start=0, step=1, limit=4
    $region2: #{tpu_custom_call.1} parent=1 // loop_pre_header
      _
    $region3: #{tpu_custom_call.1} parent=1 // loop_header
      %s17 = sphi 0, %s21
      %p18 = scmp.ge.s32.totalorder %s17, 4
      %s24 = sphi 0, %s36
      %s25 = sphi 0, %s32
      %s26 = sphi 0, %s24
      %s27 = sphi 0, %s25
      %s28 = sphi 0, %s26
      %s29 = sphi 0, %s27
      %s45 = sphi 0, %s47
      %s48 = sphi 0, %s45
      %s49 = sphi 0, %s48
      %s65 = sphi 0, %s49
      %s77 = sphi 0, %s79
      %s80 = sphi 0, %s77
      %s81 = sphi 0, %s80
      %s97 = sphi 0, %s81
      %s103 = sphi 0, %s105
      %s106 = sphi 0, %s103
      %s107 = sphi 0, %s106
      %s123 = sphi 0, %s107
    $region4: #{tpu_custom_call.1} parent=1 // loop_header_branch
      %20 = sbr.rel (%p18) target = $region8
    $region5: #{tpu_custom_call.1} parent=1 // loop_body
      %s22 = ssub.s32 %s17, 1
      %s23 = ssub.s32 %s17, 2
      %s30 = sadd.s32 1, %s25
      %p31 = scmp.ge.s32.totalorder %s30, 1
      %s32 = scalar_select %p31, 0, %s30
      %s33 = sadd.s32 1, %s24
      %s34 = scalar_select %p31, %s33, %s24
      %p35 = scmp.ge.s32.totalorder %s34, 2
      %s36 = scalar_select %p35, 0, %s34
      %s37 = sadd.s32 %s24, %s25
      %p38 = scmp.lt.s32.totalorder %s37, 0
      %s39 = scalar_select %p38, %s37, 0
      %s40 = sadd.s32 %s36, %s32
      %p41 = scmp.lt.s32.totalorder %s40, 0
      %s42 = scalar_select %p41, %s40, 0
      %s43 = ssub.s32 %s39, %s42
      %p44 = scmp.eq.s32.totalorder %s43, 0
      %s46 = sadd.s32 %s45, 1
      %s47 = scalar_select %p44, %s45, %s46
      %p50 = pneg %p44
      %p51 = scmp.eq.s32.totalorder %s17, 1
      %p52 = por %p50, %p51
      %p53 = scmp.ne.s32.totalorder %s45, %s48
      %p54 = scmp.eq.s32.totalorder %s17, 0
      %p55 = por %p53, %p54
      %p56 = scmp.ne.s32.totalorder %s45, %s48
      %p57 = scmp.eq.s32.totalorder %s22, 1
      %p58 = por %p56, %p57
      %p59 = scmp.ne.s32.totalorder %s48, %s49
      %p60 = scmp.eq.s32.totalorder %s22, 0
      %p61 = por %p59, %p60
      %p62 = scmp.ne.s32.totalorder %s48, %s49
      %p63 = scmp.eq.s32.totalorder %s23, 1
      %p64 = por %p62, %p63
      %p66 = scmp.ne.s32.totalorder %s49, %s65
      %p67 = scmp.eq.s32.totalorder %s23, 0
      %p68 = por %p66, %p67
      %s69 = sadd.s32 %s24, %s25
      %p70 = scmp.lt.s32.totalorder %s69, 0
      %s71 = scalar_select %p70, %s69, 0
      %s72 = sadd.s32 %s36, %s32
      %p73 = scmp.lt.s32.totalorder %s72, 0
      %s74 = scalar_select %p73, %s72, 0
      %s75 = ssub.s32 %s71, %s74
      %p76 = scmp.eq.s32.totalorder %s75, 0
      %s78 = sadd.s32 %s77, 1
      %s79 = scalar_select %p76, %s77, %s78
      %p82 = pneg %p76
      %p83 = scmp.eq.s32.totalorder %s17, 1
      %p84 = por %p82, %p83
      %p85 = scmp.ne.s32.totalorder %s77, %s80
      %p86 = scmp.eq.s32.totalorder %s17, 0
      %p87 = por %p85, %p86
      %p88 = scmp.ne.s32.totalorder %s77, %s80
      %p89 = scmp.eq.s32.totalorder %s22, 1
      %p90 = por %p88, %p89
      %p91 = scmp.ne.s32.totalorder %s80, %s81
      %p92 = scmp.eq.s32.totalorder %s22, 0
      %p93 = por %p91, %p92
      %p94 = scmp.ne.s32.totalorder %s80, %s81
      %p95 = scmp.eq.s32.totalorder %s23, 1
      %p96 = por %p94, %p95
      %p98 = scmp.ne.s32.totalorder %s81, %s97
      %p99 = scmp.eq.s32.totalorder %s23, 0
      %p100 = por %p98, %p99
      %s101 = ssub.s32 %s24, %s36
      %p102 = scmp.eq.s32.totalorder %s101, 0
      %s104 = sadd.s32 %s103, 1
      %s105 = scalar_select %p102, %s103, %s104
      %p108 = pneg %p102
      %p109 = scmp.eq.s32.totalorder %s17, 1
      %p110 = por %p108, %p109
      %p111 = scmp.ne.s32.totalorder %s103, %s106
      %p112 = scmp.eq.s32.totalorder %s17, 0
      %p113 = por %p111, %p112
      %p114 = scmp.ne.s32.totalorder %s103, %s106
      %p115 = scmp.eq.s32.totalorder %s22, 1
      %p116 = por %p114, %p115
      %p117 = scmp.ne.s32.totalorder %s106, %s107
      %p118 = scmp.eq.s32.totalorder %s22, 0
      %p119 = por %p117, %p118
      %p120 = scmp.ne.s32.totalorder %s106, %s107
      %p121 = scmp.eq.s32.totalorder %s23, 1
      %p122 = por %p120, %p121
      %p124 = scmp.ne.s32.totalorder %s107, %s123
      %p125 = scmp.eq.s32.totalorder %s23, 0
      %p126 = por %p124, %p125
      %p127 = scmp.le.s32.totalorder 1, %s17
      %p128 = scmp.lt.s32.totalorder %s17, 3
      %p129 = pnand %p127, %p128
      %p130 = pneg %p129
      // Predicated region
      $region9: #{tpu_custom_call.1} parent=5 // pred_check
        _
      $region10: #{tpu_custom_call.1} parent=5 // pred_check_branch
        %132 = sbr.rel (%p129) target = $region12
      $region11: #{tpu_custom_call.1} parent=5 // pred_region
        %s133 = ssub.s32 %s17, 1
      $region12: #{tpu_custom_call.1} parent=5 // pred_fallthru
        _
      %p134 = scmp.lt.s32.totalorder %s17, 2
      // Predicated region
      $region13: #{tpu_custom_call.1} parent=5 // pred_check
        %p135 = pneg %p134
      $region14: #{tpu_custom_call.1} parent=5 // pred_check_branch
        %137 = sbr.rel (%p135) target = $region16
      $region15: #{tpu_custom_call.1} parent=5 // pred_region
        // Predicated region
        $region17: #{tpu_custom_call.1} parent=15 // pred_check
          %p138 = pneg %p55
        $region18: #{tpu_custom_call.1} parent=15 // pred_check_branch
          %140 = sbr.rel (%p138) target = $region20
        $region19: #{tpu_custom_call.1} parent=15 // pred_region
          %s141 = sand.u32 %s45, 1
          %s142 = scalar_lea.sflag [#allocation3], %s141
          %s143 = sand.u32 %s45, 1
          %s144 = smul.addr %s143, 64
          %s145 = scalar_lea.vmem [#allocation2], %s144
          %s146 = sadd.s32 %s24, %s25
          %p147 = scmp.lt.s32.totalorder %s146, 0
          %s148 = scalar_select %p147, %s146, 0
          %s149 = smul.u32 8, %s148
          %s150 = ssub.s32 2, %s149
          %s151 = smul.u32 128, %s150
          %s153 = ssub.s32 1024, %s151
          %154 = vsyncadd %s142, %s153
          %p155 = scmp.ne.s32.totalorder 0, %s151
          %s156 = smul.addr %s149, 128
          %s157 = scalar_lea.hbm %s0, %s156
          %s158 = smul.u32 8, %s150
          %s159 = sshll.u32 %s145, 4
          %s160 = int_to_ptr.vmem [resolvable:$true] %s159
          %s161 = sshll.u32 %s158, 4
          %165 = dma.hbm_to_vmem [thread:$0]  (%p155), %s157, %s161, %s160, %s142, 128, 128, 8
        $region20: #{tpu_custom_call.1} parent=15 // pred_fallthru
          _
        // Predicated region
        $region21: #{tpu_custom_call.1} parent=15 // pred_check
          %p166 = pneg %p87
        $region22: #{tpu_custom_call.1} parent=15 // pred_check_branch
          %168 = sbr.rel (%p166) target = $region24
        $region23: #{tpu_custom_call.1} parent=15 // pred_region
          %s169 = sand.u32 %s77, 1
          %s170 = scalar_lea.sflag [#allocation6], %s169
          %s171 = sand.u32 %s77, 1
          %s172 = smul.addr %s171, 64
          %s173 = scalar_lea.vmem [#allocation5], %s172
          %s174 = sadd.s32 %s24, %s25
          %p175 = scmp.lt.s32.totalorder %s174, 0
          %s176 = scalar_select %p175, %s174, 0
          %s177 = smul.u32 8, %s176
          %s178 = ssub.s32 2, %s177
          %s179 = smul.u32 128, %s178
          %s181 = ssub.s32 1024, %s179
          %182 = vsyncadd %s170, %s181
          %p183 = scmp.ne.s32.totalorder 0, %s179
          %s184 = smul.addr %s177, 128
          %s185 = scalar_lea.hbm %s1, %s184
          %s186 = smul.u32 8, %s178
          %s187 = sshll.u32 %s173, 4
          %s188 = int_to_ptr.vmem [resolvable:$true] %s187
          %s189 = sshll.u32 %s186, 4
          %193 = dma.hbm_to_vmem [thread:$0]  (%p183), %s185, %s189, %s188, %s170, 128, 128, 8
        $region24: #{tpu_custom_call.1} parent=15 // pred_fallthru
          _
      $region16: #{tpu_custom_call.1} parent=5 // pred_fallthru
        _
      %p194 = scmp.le.s32.totalorder 1, %s17
      %p195 = scmp.lt.s32.totalorder %s17, 3
      %p196 = pnand %p194, %p195
      %p197 = pneg %p196
      // Predicated region
      $region25: #{tpu_custom_call.1} parent=5 // pred_check
        _
      $region26: #{tpu_custom_call.1} parent=5 // pred_check_branch
        %199 = sbr.rel (%p196) target = $region28
      $region27: #{tpu_custom_call.1} parent=5 // pred_region
        %s200 = ssub.s32 %s17, 1
        %s201 = sand.u32 %s48, 1
        %s202 = scalar_lea.sflag [#allocation3], %s201
        %s203 = sand.u32 %s48, 1
        %s204 = smul.addr %s203, 64
        %s205 = scalar_lea.vmem [#allocation2], %s204
        // Predicated region
        $region29: #{tpu_custom_call.1} parent=27 // pred_check
          %p206 = pneg %p61
        $region30: #{tpu_custom_call.1} parent=27 // pred_check_branch
          %208 = sbr.rel (%p206) target = $region32
        $region31: #{tpu_custom_call.1} parent=27 // pred_region
          %209 = dma.done %s202, 1024
        $region32: #{tpu_custom_call.1} parent=27 // pred_fallthru
          _
        %s210 = sand.u32 %s80, 1
        %s211 = scalar_lea.sflag [#allocation6], %s210
        %s212 = sand.u32 %s80, 1
        %s213 = smul.addr %s212, 64
        %s214 = scalar_lea.vmem [#allocation5], %s213
        // Predicated region
        $region33: #{tpu_custom_call.1} parent=27 // pred_check
          %p215 = pneg %p93
        $region34: #{tpu_custom_call.1} parent=27 // pred_check_branch
          %217 = sbr.rel (%p215) target = $region36
        $region35: #{tpu_custom_call.1} parent=27 // pred_region
          %218 = dma.done %s211, 1024
        $region36: #{tpu_custom_call.1} parent=27 // pred_fallthru
          _
        %s219 = sand.u32 %s48, 1
        %s220 = scalar_lea.sflag [#allocation3], %s219
        %s221 = sand.u32 %s48, 1
        %s222 = smul.addr %s221, 64
        %s223 = scalar_lea.vmem [#allocation2], %s222
        %p224 = pneg %p61
        %p225 = pneg %p58
        %s226 = sand.u32 %s80, 1
        %s227 = scalar_lea.sflag [#allocation6], %s226
        %s228 = sand.u32 %s80, 1
        %s229 = smul.addr %s228, 64
        %s230 = scalar_lea.vmem [#allocation5], %s229
        %p231 = pneg %p93
        %p232 = pneg %p90
        %p233 = pneg %p119
        %p234 = pneg %p116
        %s235 = sand.u32 %s106, 1
        %s236 = scalar_lea.sflag [#allocation4], %s235
        %s237 = sand.u32 %s106, 1
        %s238 = smul.addr %s237, 32
        %s239 = scalar_lea.vmem [#allocation7], %s238
        %s240 = sadd.s32 %s26, %s27
        %p241 = scmp.lt.s32.totalorder %s240, 0
        %s242 = scalar_select %p241, %s240, 0
        %s243 = smul.u32 8, %s242
        %s244 = ssub.s32 2, %s243
        %s245 = smul.u32 128, %s244
        %s246 = sadd.s32 %s26, %s27
        %p247 = scmp.lt.s32.totalorder %s246, 0
        %s248 = scalar_select %p247, %s246, 0
        %s249 = smul.u32 8, %s248
        %s250 = ssub.s32 2, %s249
        %s251 = smul.u32 128, %s250
        %s252 = smul.u32 4, %s26
        %p253 = scmp.eq.s32.totalorder %s27, 0
        // Predicated region
        $region37: #{tpu_custom_call.1} parent=27 // pred_check
          %p254 = pneg %p253
        $region38: #{tpu_custom_call.1} parent=27 // pred_check_branch
          %256 = sbr.rel (%p254) target = $region40
        $region39: #{tpu_custom_call.1} parent=27 // pred_region
          %257 = vst [vmem:[%s239] sm:$0xff] 0.0
          %258 = vst [vmem:[%s239 + $0x8] sm:$0xff] 0.0
          %259 = vst [vmem:[%s239 + $0x10] sm:$0xff] 0.0
          %260 = vst [vmem:[%s239 + $0x18] sm:$0xff] 0.0
        $region40: #{tpu_custom_call.1} parent=27 // pred_fallthru
          _
        %s261 = sadd.s32 %s26, %s27
        %s262 = smul.u32 %s261, 64
        %s263 = sadd.s32 %s262, 64
        %s264 = smul.u32 %s263, 128
        %p265 = scmp.le.s32.totalorder %s264, 2048
        // Predicated region
        $region41: #{tpu_custom_call.1} parent=27 // pred_check
          %p266 = pneg %p265
        $region42: #{tpu_custom_call.1} parent=27 // pred_check_branch
          %268 = sbr.rel (%p266) target = $region44
        $region43: #{tpu_custom_call.1} parent=27 // pred_region
          %v269 = vld [vmem:[%s205] sm:$0xff]
          %v270 = vld [vmem:[%s205 + $0x8] sm:$0xff]
          %v271 = vld [vmem:[%s205 + $0x10] sm:$0xff]
          %v272 = vld [vmem:[%s205 + $0x18] sm:$0xff]
          %v273 = vld [vmem:[%s205 + $0x20] sm:$0xff]
          %v274 = vld [vmem:[%s205 + $0x28] sm:$0xff]
          %v275 = vld [vmem:[%s205 + $0x30] sm:$0xff]
          %v276 = vld [vmem:[%s205 + $0x38] sm:$0xff]
          %v277 = vld [vmem:[%s214] sm:$0xff]
          %v278 = vld [vmem:[%s214 + $0x8] sm:$0xff]
          %v279 = vld [vmem:[%s214 + $0x10] sm:$0xff]
          %v280 = vld [vmem:[%s214 + $0x18] sm:$0xff]
          %v281 = vld [vmem:[%s214 + $0x20] sm:$0xff]
          %v282 = vld [vmem:[%s214 + $0x28] sm:$0xff]
          %v283 = vld [vmem:[%s214 + $0x30] sm:$0xff]
          %v284 = vld [vmem:[%s214 + $0x38] sm:$0xff]
          %v285 = vmul.f32 %v269, 0.5
          %v286 = vmul.f32 %v270, 0.5
          %v287 = vmul.f32 %v271, 0.5
          %v288 = vmul.f32 %v272, 0.5
          %v289 = vmul.f32 %v273, 0.5
          %v290 = vmul.f32 %v274, 0.5
          %v291 = vmul.f32 %v275, 0.5
          %v292 = vmul.f32 %v276, 0.5
          %v293 = vtanh.pop %v285
          %v294 = vtanh.pop %v286
          %v295 = vtanh.pop %v287
          %v296 = vtanh.pop %v288
          %v297 = vtanh.pop %v289
          %v298 = vtanh.pop %v290
          %v299 = vtanh.pop %v291
          %v300 = vtanh.pop %v292
          %v301 = vadd.f32 %v293, 1.0
          %v302 = vadd.f32 %v294, 1.0
          %v303 = vadd.f32 %v295, 1.0
          %v304 = vadd.f32 %v296, 1.0
          %v305 = vadd.f32 %v297, 1.0
          %v306 = vadd.f32 %v298, 1.0
          %v307 = vadd.f32 %v299, 1.0
          %v308 = vadd.f32 %v300, 1.0
          %v309 = vmul.f32 %v301, 0.5
          %v310 = vmul.f32 %v302, 0.5
          %v311 = vmul.f32 %v303, 0.5
          %v312 = vmul.f32 %v304, 0.5
          %v313 = vmul.f32 %v305, 0.5
          %v314 = vmul.f32 %v306, 0.5
          %v315 = vmul.f32 %v307, 0.5
          %v316 = vmul.f32 %v308, 0.5
          %v317 = vmul.f32 %v309, %v277
          %v318 = vmul.f32 %v310, %v278
          %v319 = vmul.f32 %v311, %v279
          %v320 = vmul.f32 %v312, %v280
          %v321 = vmul.f32 %v313, %v281
          %v322 = vmul.f32 %v314, %v282
          %v323 = vmul.f32 %v315, %v283
          %v324 = vmul.f32 %v316, %v284
          %v325 = vmul.f32 %v309, %v309
          %v326 = vmul.f32 %v310, %v310
          %v327 = vmul.f32 %v311, %v311
          %v328 = vmul.f32 %v312, %v312
          %v329 = vmul.f32 %v313, %v313
          %v330 = vmul.f32 %v314, %v314
          %v331 = vmul.f32 %v315, %v315
          %v332 = vmul.f32 %v316, %v316
          %v333 = vmul.f32 %v325, %v277
          %v334 = vmul.f32 %v326, %v278
          %v335 = vmul.f32 %v327, %v279
          %v336 = vmul.f32 %v328, %v280
          %v337 = vmul.f32 %v329, %v281
          %v338 = vmul.f32 %v330, %v282
          %v339 = vmul.f32 %v331, %v283
          %v340 = vmul.f32 %v332, %v284
          %v341 = vadd.f32 %v277, %v278
          %v342 = vadd.f32 %v341, %v279
          %v343 = vadd.f32 %v342, %v280
          %v344 = vadd.f32 %v343, %v281
          %v345 = vadd.f32 %v344, %v282
          %v346 = vadd.f32 %v345, %v283
          %v347 = vadd.f32 %v346, %v284
          %v348 = vadd.f32 %v347, 0.0
          %v349 = vadd.f32 %v317, %v318
          %v350 = vadd.f32 %v349, %v319
          %v351 = vadd.f32 %v350, %v320
          %v352 = vadd.f32 %v351, %v321
          %v353 = vadd.f32 %v352, %v322
          %v354 = vadd.f32 %v353, %v323
          %v355 = vadd.f32 %v354, %v324
          %v356 = vadd.f32 %v355, 0.0
          %v357 = vadd.f32 %v325, %v326
          %v358 = vadd.f32 %v357, %v327
          %v359 = vadd.f32 %v358, %v328
          %v360 = vadd.f32 %v359, %v329
          %v361 = vadd.f32 %v360, %v330
          %v362 = vadd.f32 %v361, %v331
          %v363 = vadd.f32 %v362, %v332
          %v364 = vadd.f32 %v363, 0.0
          %v365 = vadd.f32 %v333, %v334
          %v366 = vadd.f32 %v365, %v335
          %v367 = vadd.f32 %v366, %v336
          %v368 = vadd.f32 %v367, %v337
          %v369 = vadd.f32 %v368, %v338
          %v370 = vadd.f32 %v369, %v339
          %v371 = vadd.f32 %v370, %v340
          %v372 = vadd.f32 %v371, 0.0
          %v373 = vld [vmem:[%s239] sm:$0xff]
          %v374 = vadd.f32 %v373, %v348
          %375 = vst [vmem:[%s239] sm:$0xff] %v374
          %s376 = scalar_lea.vmem %s239, 8 [#allocation7]
          %v377 = vld [vmem:[%s376] sm:$0xff]
          %v378 = vadd.f32 %v377, %v356
          %379 = vst [vmem:[%s376] sm:$0xff] %v378
          %s380 = scalar_lea.vmem %s239, 16 [#allocation7]
          %v381 = vld [vmem:[%s380] sm:$0xff]
          %v382 = vadd.f32 %v381, %v364
          %383 = vst [vmem:[%s380] sm:$0xff] %v382
          %s384 = scalar_lea.vmem %s239, 24 [#allocation7]
          %v385 = vld [vmem:[%s384] sm:$0xff]
          %v386 = vadd.f32 %v385, %v372
          %387 = vst [vmem:[%s384] sm:$0xff] %v386
        $region44: #{tpu_custom_call.1} parent=27 // pred_fallthru
          _
        %p388 = scmp.gt.s32.totalorder %s264, 2048
        // Predicated region
        $region45: #{tpu_custom_call.1} parent=27 // pred_check
          %p389 = pneg %p388
        $region46: #{tpu_custom_call.1} parent=27 // pred_check_branch
          %391 = sbr.rel (%p389) target = $region48
        $region47: #{tpu_custom_call.1} parent=27 // pred_region
          %v392 = vld [vmem:[%s205] sm:$0xff]
          %v393 = vld [vmem:[%s205 + $0x8] sm:$0xff]
          %v394 = vld [vmem:[%s205 + $0x10] sm:$0xff]
          %v395 = vld [vmem:[%s205 + $0x18] sm:$0xff]
          %v396 = vld [vmem:[%s205 + $0x20] sm:$0xff]
          %v397 = vld [vmem:[%s205 + $0x28] sm:$0xff]
          %v398 = vld [vmem:[%s205 + $0x30] sm:$0xff]
          %v399 = vld [vmem:[%s205 + $0x38] sm:$0xff]
          %v400 = vld [vmem:[%s214] sm:$0xff]
          %v401 = vld [vmem:[%s214 + $0x8] sm:$0xff]
          %v402 = vld [vmem:[%s214 + $0x10] sm:$0xff]
          %v403 = vld [vmem:[%s214 + $0x18] sm:$0xff]
          %v404 = vld [vmem:[%s214 + $0x20] sm:$0xff]
          %v405 = vld [vmem:[%s214 + $0x28] sm:$0xff]
          %v406 = vld [vmem:[%s214 + $0x30] sm:$0xff]
          %v407 = vld [vmem:[%s214 + $0x38] sm:$0xff]
          %v408 = vmul.f32 %v392, 0.5
          %v409 = vmul.f32 %v393, 0.5
          %v410 = vmul.f32 %v394, 0.5
          %v411 = vmul.f32 %v395, 0.5
          %v412 = vmul.f32 %v396, 0.5
          %v413 = vmul.f32 %v397, 0.5
          %v414 = vmul.f32 %v398, 0.5
          %v415 = vmul.f32 %v399, 0.5
          %v416 = vtanh.pop %v408
          %v417 = vtanh.pop %v409
          %v418 = vtanh.pop %v410
          %v419 = vtanh.pop %v411
          %v420 = vtanh.pop %v412
          %v421 = vtanh.pop %v413
          %v422 = vtanh.pop %v414
          %v423 = vtanh.pop %v415
          %v424 = vadd.f32 %v416, 1.0
          %v425 = vadd.f32 %v417, 1.0
          %v426 = vadd.f32 %v418, 1.0
          %v427 = vadd.f32 %v419, 1.0
          %v428 = vadd.f32 %v420, 1.0
          %v429 = vadd.f32 %v421, 1.0
          %v430 = vadd.f32 %v422, 1.0
          %v431 = vadd.f32 %v423, 1.0
          %v432 = vmul.f32 %v424, 0.5
          %v433 = vmul.f32 %v425, 0.5
          %v434 = vmul.f32 %v426, 0.5
          %v435 = vmul.f32 %v427, 0.5
          %v436 = vmul.f32 %v428, 0.5
          %v437 = vmul.f32 %v429, 0.5
          %v438 = vmul.f32 %v430, 0.5
          %v439 = vmul.f32 %v431, 0.5
          %s440 = sadd.s32 %s262, 0
          %s441 = smul.u32 %s440, 128
          %v442 = vlaneseq
          %v443 = vshrl.u32 %v442, 7
          %v444 = vadd.s32 %v443, 8
          %v445 = vadd.s32 %v443, 16
          %v446 = vadd.s32 %v443, 24
          %v447 = vadd.s32 %v443, 32
          %v448 = vadd.s32 %v443, 40
          %v449 = vadd.s32 %v443, 48
          %v450 = vadd.s32 %v443, 56
          %v451 = vmul.u32 %v443, 128
          %v452 = vmul.u32 %v444, 128
          %v453 = vmul.u32 %v445, 128
          %v454 = vmul.u32 %v446, 128
          %v455 = vmul.u32 %v447, 128
          %v456 = vmul.u32 %v448, 128
          %v457 = vmul.u32 %v449, 128
          %v458 = vmul.u32 %v450, 128
          %v459 = vstv %s441
          %v460 = vadd.s32 %v459, %v451
          %v461 = vadd.s32 %v459, %v452
          %v462 = vadd.s32 %v459, %v453
          %v463 = vadd.s32 %v459, %v454
          %v464 = vadd.s32 %v459, %v455
          %v465 = vadd.s32 %v459, %v456
          %v466 = vadd.s32 %v459, %v457
          %v467 = vadd.s32 %v459, %v458
          %v468 = vlaneseq
          %v469 = vand.u32 %v468, 127
          %v470 = vadd.s32 %v460, %v469
          %v471 = vadd.s32 %v461, %v469
          %v472 = vadd.s32 %v462, %v469
          %v473 = vadd.s32 %v463, %v469
          %v474 = vadd.s32 %v464, %v469
          %v475 = vadd.s32 %v465, %v469
          %v476 = vadd.s32 %v466, %v469
          %v477 = vadd.s32 %v467, %v469
          %vm478 = vcmp.lt.s32.totalorder %v470, 2048
          %vm479 = vcmp.lt.s32.totalorder %v471, 2048
          %vm480 = vcmp.lt.s32.totalorder %v472, 2048
          %vm481 = vcmp.lt.s32.totalorder %v473, 2048
          %vm482 = vcmp.lt.s32.totalorder %v474, 2048
          %vm483 = vcmp.lt.s32.totalorder %v475, 2048
          %vm484 = vcmp.lt.s32.totalorder %v476, 2048
          %vm485 = vcmp.lt.s32.totalorder %v477, 2048
          %v486 = vsel %vm478, %v432, 0.0
          %v487 = vsel %vm479, %v433, 0.0
          %v488 = vsel %vm480, %v434, 0.0
          %v489 = vsel %vm481, %v435, 0.0
          %v490 = vsel %vm482, %v436, 0.0
          %v491 = vsel %vm483, %v437, 0.0
          %v492 = vsel %vm484, %v438, 0.0
          %v493 = vsel %vm485, %v439, 0.0
          %v494 = vsel %vm478, %v400, 0.0
          %v495 = vsel %vm479, %v401, 0.0
          %v496 = vsel %vm480, %v402, 0.0
          %v497 = vsel %vm481, %v403, 0.0
          %v498 = vsel %vm482, %v404, 0.0
          %v499 = vsel %vm483, %v405, 0.0
          %v500 = vsel %vm484, %v406, 0.0
          %v501 = vsel %vm485, %v407, 0.0
          %v502 = vmul.f32 %v486, %v494
          %v503 = vmul.f32 %v487, %v495
          %v504 = vmul.f32 %v488, %v496
          %v505 = vmul.f32 %v489, %v497
          %v506 = vmul.f32 %v490, %v498
          %v507 = vmul.f32 %v491, %v499
          %v508 = vmul.f32 %v492, %v500
          %v509 = vmul.f32 %v493, %v501
          %v510 = vmul.f32 %v486, %v486
          %v511 = vmul.f32 %v487, %v487
          %v512 = vmul.f32 %v488, %v488
          %v513 = vmul.f32 %v489, %v489
          %v514 = vmul.f32 %v490, %v490
          %v515 = vmul.f32 %v491, %v491
          %v516 = vmul.f32 %v492, %v492
          %v517 = vmul.f32 %v493, %v493
          %v518 = vmul.f32 %v510, %v494
          %v519 = vmul.f32 %v511, %v495
          %v520 = vmul.f32 %v512, %v496
          %v521 = vmul.f32 %v513, %v497
          %v522 = vmul.f32 %v514, %v498
          %v523 = vmul.f32 %v515, %v499
          %v524 = vmul.f32 %v516, %v500
          %v525 = vmul.f32 %v517, %v501
          %v526 = vadd.f32 %v494, %v495
          %v527 = vadd.f32 %v526, %v496
          %v528 = vadd.f32 %v527, %v497
          %v529 = vadd.f32 %v528, %v498
          %v530 = vadd.f32 %v529, %v499
          %v531 = vadd.f32 %v530, %v500
          %v532 = vadd.f32 %v531, %v501
          %v533 = vadd.f32 %v532, 0.0
          %v534 = vadd.f32 %v502, %v503
          %v535 = vadd.f32 %v534, %v504
          %v536 = vadd.f32 %v535, %v505
          %v537 = vadd.f32 %v536, %v506
          %v538 = vadd.f32 %v537, %v507
          %v539 = vadd.f32 %v538, %v508
          %v540 = vadd.f32 %v539, %v509
          %v541 = vadd.f32 %v540, 0.0
          %v542 = vadd.f32 %v510, %v511
          %v543 = vadd.f32 %v542, %v512
          %v544 = vadd.f32 %v543, %v513
          %v545 = vadd.f32 %v544, %v514
          %v546 = vadd.f32 %v545, %v515
          %v547 = vadd.f32 %v546, %v516
          %v548 = vadd.f32 %v547, %v517
          %v549 = vadd.f32 %v548, 0.0
          %v550 = vadd.f32 %v518, %v519
          %v551 = vadd.f32 %v550, %v520
          %v552 = vadd.f32 %v551, %v521
          %v553 = vadd.f32 %v552, %v522
          %v554 = vadd.f32 %v553, %v523
          %v555 = vadd.f32 %v554, %v524
          %v556 = vadd.f32 %v555, %v525
          %v557 = vadd.f32 %v556, 0.0
          %v558 = vld [vmem:[%s239] sm:$0xff]
          %v559 = vadd.f32 %v558, %v533
          %560 = vst [vmem:[%s239] sm:$0xff] %v559
          %s561 = scalar_lea.vmem %s239, 8 [#allocation7]
          %v562 = vld [vmem:[%s561] sm:$0xff]
          %v563 = vadd.f32 %v562, %v541
          %564 = vst [vmem:[%s561] sm:$0xff] %v563
          %s565 = scalar_lea.vmem %s239, 16 [#allocation7]
          %v566 = vld [vmem:[%s565] sm:$0xff]
          %v567 = vadd.f32 %v566, %v549
          %568 = vst [vmem:[%s565] sm:$0xff] %v567
          %s569 = scalar_lea.vmem %s239, 24 [#allocation7]
          %v570 = vld [vmem:[%s569] sm:$0xff]
          %v571 = vadd.f32 %v570, %v557
          %572 = vst [vmem:[%s569] sm:$0xff] %v571
        $region48: #{tpu_custom_call.1} parent=27 // pred_fallthru
          _
        %s573 = sand.u32 %s106, 1
        %s574 = scalar_lea.sflag [#allocation4], %s573
        %s575 = sand.u32 %s106, 1
        %s576 = smul.addr %s575, 32
        %s577 = scalar_lea.vmem [#allocation7], %s576
        // Predicated region
        $region49: #{tpu_custom_call.1} parent=27 // pred_check
          %p578 = pneg %p116
        $region50: #{tpu_custom_call.1} parent=27 // pred_check_branch
          %580 = sbr.rel (%p578) target = $region52
        $region51: #{tpu_custom_call.1} parent=27 // pred_region
          %s581 = smul.u32 4, %s26
          %s583 = ssub.s32 512, 512
          %584 = vsyncadd %s574, %s583
          %s585 = smul.addr %s581, 128
          %s586 = scalar_lea.hbm %s2, %s585
          %s587 = sshll.u32 %s577, 4
          %s588 = int_to_ptr.vmem [resolvable:$true] %s587
          %593 = dma.vmem_to_hbm [thread:$0]  %s588, 512, %s586, %s574, 128, 128, 8
        $region52: #{tpu_custom_call.1} parent=27 // pred_fallthru
          _
      $region28: #{tpu_custom_call.1} parent=5 // pred_fallthru
        _
      %p594 = scmp.le.s32.totalorder 2, %s17
      // Predicated region
      $region53: #{tpu_custom_call.1} parent=5 // pred_check
        %p595 = pneg %p594
      $region54: #{tpu_custom_call.1} parent=5 // pred_check_branch
        %597 = sbr.rel (%p595) target = $region56
      $region55: #{tpu_custom_call.1} parent=5 // pred_region
        %s598 = ssub.s32 %s17, 2
        // Predicated region
        $region57: #{tpu_custom_call.1} parent=55 // pred_check
          %p599 = pneg %p122
        $region58: #{tpu_custom_call.1} parent=55 // pred_check_branch
          %601 = sbr.rel (%p599) target = $region60
        $region59: #{tpu_custom_call.1} parent=55 // pred_region
          %s602 = sand.u32 %s107, 1
          %s603 = scalar_lea.sflag [#allocation4], %s602
          %s604 = sand.u32 %s107, 1
          %s605 = smul.addr %s604, 32
          %s606 = scalar_lea.vmem [#allocation7], %s605
          %607 = dma.done %s603, 512
        $region60: #{tpu_custom_call.1} parent=55 // pred_fallthru
          _
      $region56: #{tpu_custom_call.1} parent=5 // pred_fallthru
        _
    $region6: #{tpu_custom_call.1} parent=1 // loop_footer
      %s21 = sadd.s32 1, %s17
    $region7: #{tpu_custom_call.1} parent=1 // loop_footer_branch
      %16 = sbr.rel target = $region3
    $region8: #{tpu_custom_call.1} parent=1 // loop_exit
      _
    %608 = vsyncpa [#allocation3], 1
    %s609 = scalar_lea.sflag [#allocation3], 1
    %610 = vsyncpa %s609, 1
    %611 = vsyncpa [#allocation6], 1
    %s612 = scalar_lea.sflag [#allocation6], 1
    %613 = vsyncpa %s612, 1
    %614 = vsyncpa [#allocation4], 1
    %s615 = scalar_lea.sflag [#allocation4], 1
    %616 = vsyncpa %s615, 1

</llo_original>
